<compile_context>
chip_gen: v6e
topology: v6e:2x2x1
jax: 0.10.0
libtpu: 0.0.40
codegen_flags: <defaults>
</compile_context>

<pallas_src>
import math
import jax
import jax.numpy as jnp
from jax import lax
from jax.experimental import pallas as pl
from jax.experimental.pallas import tpu as pltpu


def _round_up(x: int, m: int) -> int:
    return ((x + m - 1) // m) * m


def _sublane_multiple(dtype) -> int:
    # second-minor tiling multiple: 8 for 4-byte, 16 for 2-byte, 32 for 1-byte
    itemsize = jnp.dtype(dtype).itemsize
    return max(8, 32 // max(itemsize, 1))


def _pick_tile(dim: int, align: int, cap: int):
    """Pick (tile, padded_dim): tile is a multiple of `align`, <= cap.

    Prefers a tile that exactly divides the align-rounded dim (so no padding
    beyond alignment is needed); only falls back to cap-sized tiles + padding
    for awkward dims, and never drops below cap//2 while searching.
    """
    d_aligned = _round_up(dim, align)
    cap = max(align, min(cap, d_aligned))
    t = (cap // align) * align
    floor = max(align, t // 2)
    tt = t
    while tt >= floor:
        if d_aligned % tt == 0:
            return tt, d_aligned
        tt -= align
    # Fallback: keep the large tile and pad the dim up to a multiple of it.
    return t, _round_up(dim, t)


def _default_config():
    """Generation-aware (tile caps, vmem_limit_bytes)."""
    try:
        info = pltpu.get_tpu_info()
        vmem_bytes = getattr(info, "vmem_capacity_bytes", None) or (64 << 20)
    except Exception:
        vmem_bytes = 64 << 20
    if vmem_bytes >= 100 * 1024 * 1024:
        # v5e / v6e: 128 MiB physical VMEM -> large tiles, generous limit.
        return (512, 1024, 2048), 96 * 1024 * 1024
    # v7x: 64 MiB physical VMEM -> scaled-down tiles, <= ~48 MiB scoped.
    return (512, 1024, 1024), 48 * 1024 * 1024


def _linear_kernel_acc(x_ref, w_ref, b_ref, o_ref, acc_ref):
    # x_ref: (tm, tk), w_ref: (tn, tk), b_ref: (1, tn), o_ref: (tm, tn)
    k = pl.program_id(2)

    @pl.when(k == 0)
    def _():
        # Fold the bias into the accumulator init (no epilogue add needed).
        acc_ref[...] = jnp.broadcast_to(
            b_ref[...].astype(jnp.float32), acc_ref.shape)

    # x @ w^T without materializing a transpose: contract the K dim of both.
    acc_ref[...] += lax.dot_general(
        x_ref[...],
        w_ref[...],
        dimension_numbers=(((1,), (1,)), ((), ())),
        preferred_element_type=jnp.float32,
    )

    @pl.when(k == pl.num_programs(2) - 1)
    def _():
        o_ref[...] = acc_ref[...].astype(o_ref.dtype)


def _linear_kernel_f32out(x_ref, w_ref, b_ref, o_ref):
    # float32 output: accumulate directly into the resident output block
    # (output BlockSpec is constant over the K axis) -- saves the tm*tn*4 B
    # scratch and the final VMEM->VMEM copy.
    k = pl.program_id(2)

    @pl.when(k == 0)
    def _():
        o_ref[...] = jnp.broadcast_to(
            b_ref[...].astype(jnp.float32), o_ref.shape)

    o_ref[...] += lax.dot_general(
        x_ref[...],
        w_ref[...],
        dimension_numbers=(((1,), (1,)), ((), ())),
        preferred_element_type=jnp.float32,
    )


def linear_pallas(x, weight, bias, *, tile_caps=None, vmem_limit_bytes=None,
                  use_bf16_mxu=False):
    """y = x @ weight^T + bias.

    x: (..., input_size); weight: (output_size, input_size); bias: (output_size,)
    """
    out_size, in_size = weight.shape
    lead_shape = x.shape[:-1]
    m = int(math.prod(lead_shape)) if lead_shape else 1
    out_dtype = x.dtype

    x2d = x.reshape(m, in_size)
    if use_bf16_mxu and x2d.dtype == jnp.float32:
        # Optional: feed the MXU bf16 operands (f32 accumulate). Numerics
        # differ slightly from the f32 reference; off by default.
        x2d = x2d.astype(jnp.bfloat16)
        weight = weight.astype(jnp.bfloat16)

    default_caps, default_vmem = _default_config()
    tm_cap, tn_cap, tk_cap = tile_caps if tile_caps is not None else default_caps
    if vmem_limit_bytes is None:
        vmem_limit_bytes = default_vmem

    # --- Tile selection (MXU / vreg aligned, padding-avoiding) --------------
    sub = max(_sublane_multiple(x2d.dtype), _sublane_multiple(out_dtype))
    tm, mp = _pick_tile(m, sub, tm_cap)
    tn, np_ = _pick_tile(out_size, 128, tn_cap)
    tk, kp = _pick_tile(in_size, 128, tk_cap)

    # Megacore (v7x has 2 TensorCores): if both parallel axes collapse to a
    # single block, split the N axis so the second core is not idle.
    if mp // tm == 1 and np_ // tn == 1 and tn > 128:
        tn, np_ = _pick_tile(out_size, 128, max(128, tn // 2))

    # Zero-pad only when the shape demands it (zeros contribute nothing to
    # the contraction; padded rows/cols are sliced off afterwards).
    if (mp, kp) != (m, in_size):
        x2d = jnp.pad(x2d, ((0, mp - m), (0, kp - in_size)))
    w2d = weight  # (N, K) -- no transpose materialized
    if (np_, kp) != (out_size, in_size):
        w2d = jnp.pad(w2d, ((0, np_ - out_size), (0, kp - in_size)))
    b2d = bias.reshape(1, out_size)
    if np_ != out_size:
        b2d = jnp.pad(b2d, ((0, 0), (0, np_ - out_size)))

    grid = (mp // tm, np_ // tn, kp // tk)
    grid_m, grid_n, grid_k = grid

    # CostEstimate including grid-induced re-reads: x is read once per N tile,
    # W once per M tile.
    cost = pl.CostEstimate(
        flops=2 * mp * np_ * kp,
        transcendentals=0,
        bytes_accessed=(
            x2d.size * x2d.dtype.itemsize * grid_n
            + w2d.size * w2d.dtype.itemsize * grid_m
            + b2d.size * b2d.dtype.itemsize * grid_m
            + mp * np_ * jnp.dtype(out_dtype).itemsize
        ),
    )

    f32_direct = jnp.dtype(out_dtype) == jnp.dtype(jnp.float32)
    kernel = _linear_kernel_f32out if f32_direct else _linear_kernel_acc
    scratch_shapes = [] if f32_direct else [pltpu.VMEM((tm, tn), jnp.float32)]

    out = pl.pallas_call(
        kernel,
        out_shape=jax.ShapeDtypeStruct((mp, np_), out_dtype),
        grid_spec=pltpu.PrefetchScalarGridSpec(
            num_scalar_prefetch=0,
            grid=grid,
            in_specs=[
                pl.BlockSpec((tm, tk), lambda i, j, k: (i, k)),   # x tile
                pl.BlockSpec((tn, tk), lambda i, j, k: (j, k)),   # W tile (N, K)
                pl.BlockSpec((1, tn), lambda i, j, k: (0, j)),    # bias tile
            ],
            out_specs=pl.BlockSpec((tm, tn), lambda i, j, k: (i, j)),
            scratch_shapes=scratch_shapes,
        ),
        compiler_params=pltpu.CompilerParams(
            dimension_semantics=("parallel", "parallel", "arbitrary"),
            vmem_limit_bytes=vmem_limit_bytes,
        ),
        cost_estimate=cost,
    )(x2d, w2d, b2d)

    out = out[:m, :out_size]
    return out.reshape(*lead_shape, out_size)


def init_linear_params(key, input_size, output_size, dtype=jnp.float32):
    # Deterministic init mimicking torch.nn.Linear default (uniform +/- 1/sqrt(in)).
    kw, kb = jax.random.split(key)
    bound = 1.0 / math.sqrt(input_size)
    weight = jax.random.uniform(kw, (output_size, input_size), dtype,
                                minval=-bound, maxval=bound)
    bias = jax.random.uniform(kb, (output_size,), dtype,
                              minval=-bound, maxval=bound)
    return weight, bias


if __name__ == "__main__":
    key = jax.random.PRNGKey(0)
    kx1, kp1, kx2, kp2 = jax.random.split(key, 4)

    # --- Test 1: module-implied small shape (batch, num_columns, input_size)
    batch, num_cols = 2, 4
    input_size, output_size = 32, 16
    x = jax.random.normal(kx1, (batch, num_cols, input_size), jnp.float32)
    weight, bias = init_linear_params(kp1, input_size, output_size)

    y = linear_pallas(x, weight, bias)
    jax.block_until_ready(y)
    y_ref = x @ weight.T + bias
    assert y.shape == (batch, num_cols, output_size)
    assert jnp.allclose(y, y_ref, atol=1e-5, rtol=1e-5)

    # --- Test 2: multiple tiles on every grid axis (small tile caps forced)
    # exercises the K-tiled accumulation, megacore-parallel M/N axes and the
    # padding path (300 / 200 are not multiples of 128).
    x2 = jax.random.normal(kx2, (3, 8, 300), jnp.float32)
    w2, b2 = init_linear_params(kp2, 300, 200)
    y2 = linear_pallas(x2, w2, b2, tile_caps=(16, 128, 128))
    jax.block_until_ready(y2)
    y2_ref = x2 @ w2.T + b2
    assert y2.shape == (3, 8, 200)
    assert jnp.allclose(y2, y2_ref, atol=1e-4, rtol=1e-4)

    print("KERNEL_OK")
</pallas_src>

<mosaic_0001>
module attributes {stable_mosaic.version = 11 : i64} {
  func.func @_linear_kernel_f32out(%arg0: i32, %arg1: i32, %arg2: i32, %arg3: memref<8x128xf32, #tpu.memory_space<vmem>>, %arg4: memref<128x128xf32, #tpu.memory_space<vmem>>, %arg5: memref<1x128xf32, #tpu.memory_space<vmem>>, %arg6: memref<8x128xf32, #tpu.memory_space<vmem>>) attributes {dimension_semantics = [#tpu.dimension_semantics<parallel>, #tpu.dimension_semantics<parallel>, #tpu.dimension_semantics<arbitrary>], iteration_bounds = array<i64: 1, 1, 1>, scalar_prefetch = 0 : i64, scratch_operands = 0 : i64, tpu.core_type = #tpu.core_type<tc>, window_params = [{transform_indices = @transform_0, window_bounds = array<i64: 8, 128>}, {transform_indices = @transform_1, window_bounds = array<i64: 128, 128>}, {transform_indices = @transform_2, window_bounds = array<i64: 1, 128>}, {transform_indices = @transform_3, window_bounds = array<i64: 8, 128>}]} {
    %c0_i32 = arith.constant 0 : i32
    %0 = arith.cmpi eq, %arg2, %c0_i32 : i32
    %1 = arith.extui %0 : i1 to i32
    %c0_i32_0 = arith.constant 0 : i32
    %2 = arith.cmpi ne, %1, %c0_i32_0 : i32
    scf.if %2 {
      %c0_8 = arith.constant 0 : index
      %c0_9 = arith.constant 0 : index
      %9 = vector.load %arg5[%c0_8, %c0_9] : memref<1x128xf32, #tpu.memory_space<vmem>>, vector<1x128xf32>
      %10 = vector.shape_cast %9 : vector<1x128xf32> to vector<1x128xf32>
      %11 = vector.broadcast %10 : vector<1x128xf32> to vector<8x128xf32>
      %c0_10 = arith.constant 0 : index
      %c0_11 = arith.constant 0 : index
      %12 = vector.load %arg6[%c0_10, %c0_11] : memref<8x128xf32, #tpu.memory_space<vmem>>, vector<8x128xf32>
      tpu.vector_store %arg6[%c0_10, %c0_11], %11 {strides = array<i32>} : memref<8x128xf32, #tpu.memory_space<vmem>>, vector<8x128xf32>,
    } else {
    }
    %c0 = arith.constant 0 : index
    %c0_1 = arith.constant 0 : index
    %3 = vector.load %arg6[%c0, %c0_1] : memref<8x128xf32, #tpu.memory_space<vmem>>, vector<8x128xf32>
    %c0_2 = arith.constant 0 : index
    %c0_3 = arith.constant 0 : index
    %4 = vector.load %arg3[%c0_2, %c0_3] : memref<8x128xf32, #tpu.memory_space<vmem>>, vector<8x128xf32>
    %c0_4 = arith.constant 0 : index
    %c0_5 = arith.constant 0 : index
    %5 = vector.load %arg4[%c0_4, %c0_5] : memref<128x128xf32, #tpu.memory_space<vmem>>, vector<128x128xf32>
    %cst = arith.constant dense<0.000000e+00> : vector<8x128xf32>
    %6 = tpu.matmul %4, %5, %cst {dimension_numbers = #tpu.dot_dimension_numbers<[1], [1], [0], [0], [0, 0, 1, 0], [], []>} : vector<8x128xf32>, vector<128x128xf32>, vector<8x128xf32> -> vector<8x128xf32>
    %7 = arith.addf %3, %6 : vector<8x128xf32>
    %c0_6 = arith.constant 0 : index
    %c0_7 = arith.constant 0 : index
    %8 = vector.load %arg6[%c0_6, %c0_7] : memref<8x128xf32, #tpu.memory_space<vmem>>, vector<8x128xf32>
    tpu.vector_store %arg6[%c0_6, %c0_7], %7 {strides = array<i32>} : memref<8x128xf32, #tpu.memory_space<vmem>>, vector<8x128xf32>,
    return
  }
  func.func @transform_0(%arg0: i32, %arg1: i32, %arg2: i32) -> (i32, i32) {
    %c0_i32 = arith.constant 0 : i32
    return %arg0, %arg2 : i32, i32
  }
  func.func @transform_1(%arg0: i32, %arg1: i32, %arg2: i32) -> (i32, i32) {
    %c0_i32 = arith.constant 0 : i32
    return %arg1, %arg2 : i32, i32
  }
  func.func @transform_2(%arg0: i32, %arg1: i32, %arg2: i32) -> (i32, i32) {
    %c0_i32 = arith.constant 0 : i32
    %c0_i32_0 = arith.constant 0 : i32
    return %c0_i32, %arg1 : i32, i32
  }
  func.func @transform_3(%arg0: i32, %arg1: i32, %arg2: i32) -> (i32, i32) {
    %c0_i32 = arith.constant 0 : i32
    return %arg0, %arg1 : i32, i32
  }
}

</mosaic_0001>

<llo_original>
// kernel: tpu_custom_call.1
$region0: #{tpu_custom_call.1}
  #allocation0 [shape = 'u32[]', space=smem, size = 0x4, offset = 0x4, fixed_abs, tag = 'smem constant byte address 0x4 - core index']
  #allocation1 [shape = 'u32[144,128]{1,0:T(1,128)}', space=vmem, size = 0x12000, scoped, tag = 'internal scratch']
  %s0 = inlined_call_operand.hbm [shape: f32[8,128], index: 0, kind: input, shape index: {}]
  %s1 = inlined_call_operand.hbm [shape: f32[128,128], index: 1, kind: input, shape index: {}]
  %s2 = inlined_call_operand.vmem [shape: f32[1,128], index: 2, kind: input, shape index: {}]
  %s3 = inlined_call_operand.hbm [shape: f32[8,128], index: 3, kind: output, shape index: {}]
  %s4 = sld [smem:[#allocation0]]
  $region34: #{tpu_custom_call.1} parent=0
    _
  %s6 = ssub.s32 1, %s4
  %s7 = scalar_select 0, %s6, %s4
  $region1: #{tpu_custom_call.1} parent=0
    #allocation2 [shape = 'u8[4096]{0}', space=vmem, size = 0x1000, scoped, tag = 'input window, operand 0, single buffered']
    #allocation3 [shape = 's32[1]{0}', space=sflag, size = 0x4, scoped, tag = 'scoped memory for tpu_custom_call.1']
    #allocation4 [shape = 's32[1]{0}', space=sflag, size = 0x4, scoped, tag = 'scoped memory for tpu_custom_call.1']
    #allocation5 [shape = 'u8[65536]{0}', space=vmem, size = 0x10000, scoped, tag = 'input window, operand 1, single buffered']
    #allocation6 [shape = 's32[1]{0}', space=sflag, size = 0x4, scoped, tag = 'scoped memory for tpu_custom_call.1']
    #allocation7 [shape = 'u8[4096]{0}', space=vmem, size = 0x1000, scoped, tag = 'output window, operand 0, single buffered']
    %8 = vsyncpa [#allocation3], 0
    %9 = vsyncpa [#allocation6], 0
    %10 = vsyncpa [#allocation4], 0
    // Predicated region
    $region2: #{tpu_custom_call.1} parent=1 // pred_check
      _
    $region3: #{tpu_custom_call.1} parent=1 // pred_check_branch
      %12 = sbr.rel (0) target = $region5
    $region4: #{tpu_custom_call.1} parent=1 // pred_region
      %s14 = ssub.s32 128, 128
      %15 = vsyncadd [#allocation3], %s14
      %s17 = sshll.u32 [#allocation2], 4
      %s18 = int_to_ptr.vmem [resolvable:$true] %s17
      %20 = dma.hbm_to_vmem [thread:$0]  %s0, 128, %s18, [#allocation3]
    $region5: #{tpu_custom_call.1} parent=1 // pred_fallthru
      _
    // Predicated region
    $region6: #{tpu_custom_call.1} parent=1 // pred_check
      _
    $region7: #{tpu_custom_call.1} parent=1 // pred_check_branch
      %22 = sbr.rel (0) target = $region9
    $region8: #{tpu_custom_call.1} parent=1 // pred_region
      %s24 = ssub.s32 2048, 2048
      %25 = vsyncadd [#allocation6], %s24
      %s26 = sshll.u32 [#allocation5], 4
      %s27 = int_to_ptr.vmem [resolvable:$true] %s26
      %32 = dma.hbm_to_vmem [thread:$0]  %s1, 2048, %s27, [#allocation6], 128, 128, 8
    $region9: #{tpu_custom_call.1} parent=1 // pred_fallthru
      _
    // Predicated region
    $region10: #{tpu_custom_call.1} parent=1 // pred_check
      _
    $region11: #{tpu_custom_call.1} parent=1 // pred_check_branch
      %34 = sbr.rel (0) target = $region13
    $region12: #{tpu_custom_call.1} parent=1 // pred_region
      _
    $region13: #{tpu_custom_call.1} parent=1 // pred_fallthru
      _
    // Predicated region
    $region14: #{tpu_custom_call.1} parent=1 // pred_check
      _
    $region15: #{tpu_custom_call.1} parent=1 // pred_check_branch
      %36 = sbr.rel (0) target = $region17
    $region16: #{tpu_custom_call.1} parent=1 // pred_region
      %37 = dma.done [#allocation3], 128
    $region17: #{tpu_custom_call.1} parent=1 // pred_fallthru
      _
    // Predicated region
    $region18: #{tpu_custom_call.1} parent=1 // pred_check
      _
    $region19: #{tpu_custom_call.1} parent=1 // pred_check_branch
      %39 = sbr.rel (0) target = $region21
    $region20: #{tpu_custom_call.1} parent=1 // pred_region
      %40 = dma.done [#allocation6], 2048
    $region21: #{tpu_custom_call.1} parent=1 // pred_fallthru
      _
    %p41 = scmp.eq.s32.totalorder 0, 0
    // Predicated region
    $region22: #{tpu_custom_call.1} parent=1 // pred_check
      %p42 = pneg %p41
    $region23: #{tpu_custom_call.1} parent=1 // pred_check_branch
      %44 = sbr.rel (%p42) target = $region25
    $region24: #{tpu_custom_call.1} parent=1 // pred_region
      %v45 = vld [vmem:[%s2] sm:$0x1]
      %v47 = vlaneseq
      %v48 = vshrl.u32 %v47, 7
      %v49 = vsub.s32 0, %v48
      %v50 = vrot.slane %v45, %v49
      %52 = vst [vmem:[#allocation7] sm:$0xff] %v50
    $region25: #{tpu_custom_call.1} parent=1 // pred_fallthru
      _
    %v53 = vld [vmem:[#allocation7] sm:$0xff]
    %v54 = vld [vmem:[#allocation2] sm:$0xff]
    %v55 = vld [vmem:[#allocation5] sm:$0xff]
    %v56 = vld [vmem:[#allocation5 + $0x8] sm:$0xff]
    %v57 = vld [vmem:[#allocation5 + $0x10] sm:$0xff]
    %v58 = vld [vmem:[#allocation5 + $0x18] sm:$0xff]
    %v59 = vld [vmem:[#allocation5 + $0x20] sm:$0xff]
    %v60 = vld [vmem:[#allocation5 + $0x28] sm:$0xff]
    %v61 = vld [vmem:[#allocation5 + $0x30] sm:$0xff]
    %v62 = vld [vmem:[#allocation5 + $0x38] sm:$0xff]
    %v63 = vld [vmem:[#allocation5 + $0x40] sm:$0xff]
    %v64 = vld [vmem:[#allocation5 + $0x48] sm:$0xff]
    %v65 = vld [vmem:[#allocation5 + $0x50] sm:$0xff]
    %v66 = vld [vmem:[#allocation5 + $0x58] sm:$0xff]
    %v67 = vld [vmem:[#allocation5 + $0x60] sm:$0xff]
    %v68 = vld [vmem:[#allocation5 + $0x68] sm:$0xff]
    %v69 = vld [vmem:[#allocation5 + $0x70] sm:$0xff]
    %v70 = vld [vmem:[#allocation5 + $0x78] sm:$0xff]
    %71 = vmatprep.subr.mxu0 0.0
    %72 = vmatpush1.xpose.msra.mxu0 %v70
    %73 = vmatprep.subr.mxu0 0.0
    %74 = vmatpush1.xpose.msra.mxu0 %v69
    %75 = vmatprep.subr.mxu0 0.0
    %76 = vmatpush1.xpose.msra.mxu0 %v68
    %77 = vmatprep.subr.mxu0 0.0
    %78 = vmatpush1.xpose.msra.mxu0 %v67
    %79 = vmatprep.subr.mxu0 0.0
    %80 = vmatpush1.xpose.msra.mxu0 %v66
    %81 = vmatprep.subr.mxu0 0.0
    %82 = vmatpush1.xpose.msra.mxu0 %v65
    %83 = vmatprep.subr.mxu0 0.0
    %84 = vmatpush1.xpose.msra.mxu0 %v64
    %85 = vmatprep.subr.mxu0 0.0
    %86 = vmatpush1.xpose.msra.mxu0 %v63
    %87 = vmatprep.subr.mxu0 0.0
    %88 = vmatpush1.xpose.msra.mxu0 %v62
    %89 = vmatprep.subr.mxu0 0.0
    %90 = vmatpush1.xpose.msra.mxu0 %v61
    %91 = vmatprep.subr.mxu0 0.0
    %92 = vmatpush1.xpose.msra.mxu0 %v60
    %93 = vmatprep.subr.mxu0 0.0
    %94 = vmatpush1.xpose.msra.mxu0 %v59
    %95 = vmatprep.subr.mxu0 0.0
    %96 = vmatpush1.xpose.msra.mxu0 %v58
    %97 = vmatprep.subr.mxu0 0.0
    %98 = vmatpush1.xpose.msra.mxu0 %v57
    %99 = vmatprep.subr.mxu0 0.0
    %100 = vmatpush1.xpose.msra.mxu0 %v56
    %101 = vmatprep.subr.mxu0 0.0
    %102 = vmatpush1.xpose.msra.mxu0 %v55
    %103 = vmatprep.subr.mxu0 0.0
    %104 = vmatpush2.xpose.msra.mxu0 0.0
    %105 = vmatprep.subr.mxu0 0.0
    %106 = vmatpush2.xpose.msra.mxu0 0.0
    %107 = vmatprep.subr.mxu0 0.0
    %108 = vmatpush2.xpose.msra.mxu0 0.0
    %109 = vmatprep.subr.mxu0 0.0
    %110 = vmatpush2.xpose.msra.mxu0 0.0
    %111 = vmatprep.subr.mxu0 0.0
    %112 = vmatpush2.xpose.msra.mxu0 0.0
    %113 = vmatprep.subr.mxu0 0.0
    %114 = vmatpush2.xpose.msra.mxu0 0.0
    %115 = vmatprep.subr.mxu0 0.0
    %116 = vmatpush2.xpose.msra.mxu0 0.0
    %117 = vmatprep.subr.mxu0 0.0
    %118 = vmatpush2.xpose.msra.mxu0 0.0
    %119 = vmatprep.subr.mxu0 0.0
    %120 = vmatpush2.xpose.msra.mxu0 0.0
    %121 = vmatprep.subr.mxu0 0.0
    %122 = vmatpush2.xpose.msra.mxu0 0.0
    %123 = vmatprep.subr.mxu0 0.0
    %124 = vmatpush2.xpose.msra.mxu0 0.0
    %125 = vmatprep.subr.mxu0 0.0
    %126 = vmatpush2.xpose.msra.mxu0 0.0
    %127 = vmatprep.subr.mxu0 0.0
    %128 = vmatpush2.xpose.msra.mxu0 0.0
    %129 = vmatprep.subr.mxu0 0.0
    %130 = vmatpush2.xpose.msra.mxu0 0.0
    %131 = vmatprep.subr.mxu0 0.0
    %132 = vmatpush2.xpose.msra.mxu0 0.0
    %133 = vmatprep.subr.mxu0 0.0
    %134 = vmatpush2.xpose.msra.mxu0 0.0
    %135 = vmatprep.mubr.f32.mxu0 0.0
    %136 = vmatmul.mubr.f32.gmra.mxu0 %v54
    %v137 = vpop.f32.mrf.mxu0
    %v138 = vadd.f32 0.0, %v137
    %v139 = vpop.f32.mrf.mxu0
    %140 = vdwg.mxu0
    %v141 = vadd.f32 %v53, %v138
    %142 = vst [vmem:[#allocation7] sm:$0xff] %v141
    // Predicated region
    $region26: #{tpu_custom_call.1} parent=1 // pred_check
      _
    $region27: #{tpu_custom_call.1} parent=1 // pred_check_branch
      %144 = sbr.rel (0) target = $region29
    $region28: #{tpu_custom_call.1} parent=1 // pred_region
      %s146 = ssub.s32 128, 128
      %147 = vsyncadd [#allocation4], %s146
      %s149 = sshll.u32 [#allocation7], 4
      %s150 = int_to_ptr.vmem [resolvable:$true] %s149
      %152 = dma.vmem_to_hbm [thread:$0]  %s150, 128, %s3, [#allocation4]
    $region29: #{tpu_custom_call.1} parent=1 // pred_fallthru
      _
    // Predicated region
    $region30: #{tpu_custom_call.1} parent=1 // pred_check
      _
    $region31: #{tpu_custom_call.1} parent=1 // pred_check_branch
      %154 = sbr.rel (0) target = $region33
    $region32: #{tpu_custom_call.1} parent=1 // pred_region
      %155 = dma.done [#allocation4], 128
    $region33: #{tpu_custom_call.1} parent=1 // pred_fallthru
      _
    %156 = vsyncpa [#allocation3], 1
    %157 = vsyncpa [#allocation6], 1
    %158 = vsyncpa [#allocation4], 1

</llo_original>
